<compile_context>
chip_gen: v7x
topology: tpu7x:2x2x1
jax: 0.10.0
libtpu: 0.0.40
codegen_flags: <defaults>
</compile_context>

<pallas_src>
import functools

import jax
import jax.numpy as jnp
from jax.experimental import pallas as pl
from jax.experimental.pallas import tpu as pltpu


def _round_up(x, m):
    return (x + m - 1) // m * m


# --------------------------------------------------------------------------
# Kernel: 3 fused matmuls, parameters carved from one packed VMEM slab.
# --------------------------------------------------------------------------
def _split_policy_kernel(x_ref, p_ref, out_ref, *, d_in, hp, npad,
                         w2_row, w3_row, b1_row, b2_row, b3_row):
    x = x_ref[...]

    # Static, 8-row / 128-lane aligned slices -> zero-cost views of the slab.
    w1 = p_ref[0:d_in, 0:hp]                         # (D, HP)
    b1 = p_ref[b1_row:b1_row + 1, 0:hp]              # (1, HP)
    h1 = jnp.tanh(jnp.dot(x, w1, preferred_element_type=jnp.float32) + b1)

    w2 = p_ref[w2_row:w2_row + hp, 0:hp]             # (HP, HP) block-diag
    b2 = p_ref[b2_row:b2_row + 1, 0:hp]
    h2 = jnp.tanh(jnp.dot(h1, w2, preferred_element_type=jnp.float32) + b2)

    w3 = p_ref[w3_row:w3_row + hp, 0:npad]           # (HP, 128) block-diag
    b3 = p_ref[b3_row:b3_row + 1, 0:npad]
    y = jnp.dot(h2, w3, preferred_element_type=jnp.float32) + b3

    out_ref[...] = y.astype(out_ref.dtype)


# --------------------------------------------------------------------------
# Host-side parameter packing (one-time): one slab, 8-row-aligned sections.
# --------------------------------------------------------------------------
def pack_split_policy_params(params):
    """Pack the 3 heads into a single fused / block-diagonal f32 slab.

    Column order of the final layer is [value | contact | actuator], matching
    the reference's (value, cat(contact, actuator)) output structure.  All
    padding is zeros, so the fused forward is numerically identical to the
    unfused reference (tanh(0)=0 and zero weight blocks contribute 0.0).
    """
    wc1, bc1, wc2, bc2, wc3, bc3 = params["critic_full"]
    wa1, ba1, wa2, ba2, wa3, ba3 = params["actor_contact"]
    wu1, bu1, wu2, bu2, wu3, bu3 = params["actor_actuator"]

    d_in = wc1.shape[0]
    hidden = wc1.shape[1]
    h3 = 3 * hidden                                    # fused hidden width
    n_out = wc3.shape[1] + wa3.shape[1] + wu3.shape[1]  # 1 + 7*num_feet

    hp = _round_up(h3, 128)          # padded hidden width (lane multiple)
    npad = _round_up(n_out, 128)     # lane-dense output width (>= 128)
    p_cols = max(hp, npad)

    dp = _round_up(d_in, 8)
    w2_row = dp
    w3_row = dp + hp
    b1_row = dp + 2 * hp
    b2_row = b1_row + 8
    b3_row = b2_row + 8
    n_rows = b3_row + 8              # multiple of 8 by construction

    w1 = jnp.concatenate([wc1, wa1, wu1], axis=1)       # (D, 3H)
    b1 = jnp.concatenate([bc1, ba1, bu1], axis=1)       # (1, 3H)
    w2 = jax.scipy.linalg.block_diag(wc2, wa2, wu2)     # (3H, 3H)
    b2 = jnp.concatenate([bc2, ba2, bu2], axis=1)       # (1, 3H)
    w3 = jax.scipy.linalg.block_diag(wc3, wa3, wu3)     # (3H, n_out)
    b3 = jnp.concatenate([bc3, ba3, bu3], axis=1)       # (1, n_out)

    slab = jnp.zeros((n_rows, p_cols), jnp.float32)
    slab = slab.at[0:d_in, 0:h3].set(w1)
    slab = slab.at[w2_row:w2_row + h3, 0:h3].set(w2)
    slab = slab.at[w3_row:w3_row + h3, 0:n_out].set(w3)
    slab = slab.at[b1_row, 0:h3].set(b1[0])
    slab = slab.at[b2_row, 0:h3].set(b2[0])
    slab = slab.at[b3_row, 0:n_out].set(b3[0])

    meta = dict(d_in=d_in, hidden=hidden, h3=h3, n_out=n_out,
                hp=hp, npad=npad,
                w2_row=w2_row, w3_row=w3_row,
                b1_row=b1_row, b2_row=b2_row, b3_row=b3_row)
    return slab, meta


# --------------------------------------------------------------------------
# Forward pass wrapper.
# --------------------------------------------------------------------------
def split_policy_forward(inputs, rnn_hxs, masks, packed, *, batch_tile=1024):
    """Returns (value, action_mean, rnn_hxs).  `packed` from
    pack_split_policy_params."""
    slab, meta = packed
    batch, d_in = inputs.shape
    assert d_in == meta["d_in"]
    n_out, npad, hp = meta["n_out"], meta["npad"], meta["hp"]

    kernel = functools.partial(
        _split_policy_kernel,
        d_in=d_in, hp=hp, npad=npad,
        w2_row=meta["w2_row"], w3_row=meta["w3_row"],
        b1_row=meta["b1_row"], b2_row=meta["b2_row"], b3_row=meta["b3_row"])

    def _cost(rows):
        flops = 2 * rows * (d_in * hp + hp * hp + hp * npad)
        return pl.CostEstimate(
            flops=flops,
            transcendentals=2 * rows * hp,
            bytes_accessed=4 * (rows * d_in + slab.size + rows * npad))

    vmem_spec = pl.BlockSpec(memory_space=pltpu.MemorySpace.VMEM)

    if batch <= batch_tile:
        # Small batch: grid-less, single-buffered, whole arrays in VMEM.
        out = pl.pallas_call(
            kernel,
            in_specs=[vmem_spec, vmem_spec],
            out_specs=vmem_spec,
            out_shape=jax.ShapeDtypeStruct((batch, npad), jnp.float32),
            cost_estimate=_cost(batch),
        )(inputs, slab)
    else:
        # Large batch: cdiv grid with a zero-padded last tile (never fall back
        # to whole-batch-in-VMEM).  Few large steps; "parallel" so v7x's two
        # TensorCores each take a contiguous chunk.
        n_tiles = pl.cdiv(batch, batch_tile)
        padded = n_tiles * batch_tile
        x = inputs if padded == batch else jnp.pad(
            inputs, ((0, padded - batch), (0, 0)))
        out = pl.pallas_call(
            kernel,
            grid=(n_tiles,),
            in_specs=[
                pl.BlockSpec((batch_tile, d_in), lambda i: (i, 0)),
                pl.BlockSpec(slab.shape, lambda i: (0, 0)),
            ],
            out_specs=pl.BlockSpec((batch_tile, npad), lambda i: (i, 0)),
            out_shape=jax.ShapeDtypeStruct((padded, npad), jnp.float32),
            compiler_params=pltpu.CompilerParams(
                dimension_semantics=("parallel",)),
            cost_estimate=_cost(padded),
        )(x, slab)
        out = out[:batch]

    value = out[:, :1]
    action_mean = out[:, 1:n_out]
    return value, action_mean, rnn_hxs


# --------------------------------------------------------------------------
# Parameter init (matches the PyTorch module's orthogonal init + zero bias).
# --------------------------------------------------------------------------
def _orthogonal(key, shape, gain):
    return gain * jax.nn.initializers.orthogonal()(key, shape, jnp.float32)


def init_split_policy_params(key, num_inputs, num_outputs, hidden_size=64,
                             num_feet=1):
    assert num_outputs == (4 + 3) * num_feet
    gains = {
        "critic_full": (jnp.sqrt(2.0), jnp.sqrt(2.0), 1.0),
        "actor_contact": (jnp.sqrt(2.0), jnp.sqrt(2.0), 0.02),
        "actor_actuator": (jnp.sqrt(2.0), jnp.sqrt(2.0), 0.02),
    }
    out_dims = {
        "critic_full": 1,
        "actor_contact": 4 * num_feet,
        "actor_actuator": 3 * num_feet,
    }
    params = {}
    keys = jax.random.split(key, 9)
    k = 0
    for name in ("critic_full", "actor_contact", "actor_actuator"):
        g1, g2, g3 = gains[name]
        d_out = out_dims[name]
        w1 = _orthogonal(keys[k], (num_inputs, hidden_size), g1); k += 1
        w2 = _orthogonal(keys[k], (hidden_size, hidden_size), g2); k += 1
        w3 = _orthogonal(keys[k], (hidden_size, d_out), g3); k += 1
        b1 = jnp.zeros((1, hidden_size), jnp.float32)
        b2 = jnp.zeros((1, hidden_size), jnp.float32)
        b3 = jnp.zeros((1, d_out), jnp.float32)
        params[name] = (w1, b1, w2, b2, w3, b3)
    return params


# --------------------------------------------------------------------------
# Pure-JAX reference (unfused, mirrors the PyTorch forward).
# --------------------------------------------------------------------------
def reference_forward(inputs, rnn_hxs, masks, params):
    def mlp(p, x):
        w1, b1, w2, b2, w3, b3 = p
        h1 = jnp.tanh(x @ w1 + b1)
        h2 = jnp.tanh(h1 @ w2 + b2)
        return h2 @ w3 + b3

    value = mlp(params["critic_full"], inputs)
    y1 = mlp(params["actor_contact"], inputs)
    y2 = mlp(params["actor_actuator"], inputs)
    return value, jnp.concatenate([y1, y2], axis=1), rnn_hxs


if __name__ == "__main__":
    B = 8
    num_inputs = 32
    hidden_size = 64
    num_feet = 1
    num_outputs = (4 + 3) * num_feet

    key = jax.random.PRNGKey(0)
    k_params, k_x, k_h, k_big = jax.random.split(key, 4)

    params = init_split_policy_params(
        k_params, num_inputs, num_outputs, hidden_size, num_feet
    )
    packed = pack_split_policy_params(params)

    inputs = jax.random.normal(k_x, (B, num_inputs), jnp.float32)
    rnn_hxs = jax.random.normal(k_h, (B, hidden_size), jnp.float32)
    masks = jnp.ones((B, 1), jnp.float32)

    # --- small-batch (grid-less) path ---
    value, action_mean, rnn_out = split_policy_forward(
        inputs, rnn_hxs, masks, packed
    )
    jax.block_until_ready((value, action_mean, rnn_out))

    v_ref, a_ref, _ = reference_forward(inputs, rnn_hxs, masks, params)
    assert value.shape == (B, 1)
    assert action_mean.shape == (B, num_outputs)
    assert jnp.allclose(value, v_ref, atol=1e-5)
    assert jnp.allclose(action_mean, a_ref, atol=1e-5)
    assert jnp.array_equal(rnn_out, rnn_hxs)

    # --- large-batch (parallel, padded cdiv grid) path; non-divisible batch ---
    B_big = 1500
    x_big = jax.random.normal(k_big, (B_big, num_inputs), jnp.float32)
    h_big = jnp.zeros((B_big, hidden_size), jnp.float32)
    m_big = jnp.ones((B_big, 1), jnp.float32)
    v_big, a_big, _ = split_policy_forward(x_big, h_big, m_big, packed)
    jax.block_until_ready((v_big, a_big))
    v_big_ref, a_big_ref, _ = reference_forward(x_big, h_big, m_big, params)
    assert v_big.shape == (B_big, 1)
    assert a_big.shape == (B_big, num_outputs)
    assert jnp.allclose(v_big, v_big_ref, atol=1e-4)
    assert jnp.allclose(a_big, a_big_ref, atol=1e-4)

    print("KERNEL_OK")
</pallas_src>

<mosaic_0001>
module attributes {stable_mosaic.version = 11 : i64} {
  func.func @_split_policy_kernel(%arg0: memref<8x32xf32, #tpu.memory_space<vmem>>, %arg1: memref<568x256xf32, #tpu.memory_space<vmem>>, %arg2: memref<8x128xf32, #tpu.memory_space<vmem>>) attributes {dimension_semantics = [], scalar_prefetch = 0 : i64, scratch_operands = 0 : i64, tpu.core_type = #tpu.core_type<tc>} {
    %c0 = arith.constant 0 : index
    %c0_0 = arith.constant 0 : index
    %0 = vector.load %arg0[%c0, %c0_0] : memref<8x32xf32, #tpu.memory_space<vmem>>, vector<8x32xf32>
    %c0_1 = arith.constant 0 : index
    %c0_2 = arith.constant 0 : index
    %1 = vector.load %arg1[%c0_1, %c0_2] : memref<568x256xf32, #tpu.memory_space<vmem>>, vector<32x256xf32>
    %c544 = arith.constant 544 : index
    %c0_3 = arith.constant 0 : index
    %2 = vector.load %arg1[%c544, %c0_3] : memref<568x256xf32, #tpu.memory_space<vmem>>, vector<1x256xf32>
    %cst = arith.constant dense<0.000000e+00> : vector<8x256xf32>
    %3 = tpu.matmul %0, %1, %cst {dimension_numbers = #tpu.dot_dimension_numbers<[1], [0], [0], [1], [0, 0, 1, 1], [], []>} : vector<8x32xf32>, vector<32x256xf32>, vector<8x256xf32> -> vector<8x256xf32>
    %4 = vector.broadcast %2 : vector<1x256xf32> to vector<8x256xf32>
    %5 = arith.addf %3, %4 : vector<8x256xf32>
    %6 = math.tanh %5 : vector<8x256xf32>
    %c32 = arith.constant 32 : index
    %c0_4 = arith.constant 0 : index
    %7 = vector.load %arg1[%c32, %c0_4] : memref<568x256xf32, #tpu.memory_space<vmem>>, vector<256x256xf32>
    %c552 = arith.constant 552 : index
    %c0_5 = arith.constant 0 : index
    %8 = vector.load %arg1[%c552, %c0_5] : memref<568x256xf32, #tpu.memory_space<vmem>>, vector<1x256xf32>
    %cst_6 = arith.constant dense<0.000000e+00> : vector<8x256xf32>
    %9 = tpu.matmul %6, %7, %cst_6 {dimension_numbers = #tpu.dot_dimension_numbers<[1], [0], [0], [1], [0, 0, 1, 1], [], []>} : vector<8x256xf32>, vector<256x256xf32>, vector<8x256xf32> -> vector<8x256xf32>
    %10 = vector.broadcast %8 : vector<1x256xf32> to vector<8x256xf32>
    %11 = arith.addf %9, %10 : vector<8x256xf32>
    %12 = math.tanh %11 : vector<8x256xf32>
    %c288 = arith.constant 288 : index
    %c0_7 = arith.constant 0 : index
    %13 = vector.load %arg1[%c288, %c0_7] : memref<568x256xf32, #tpu.memory_space<vmem>>, vector<256x128xf32>
    %c560 = arith.constant 560 : index
    %c0_8 = arith.constant 0 : index
    %14 = vector.load %arg1[%c560, %c0_8] : memref<568x256xf32, #tpu.memory_space<vmem>>, vector<1x128xf32>
    %cst_9 = arith.constant dense<0.000000e+00> : vector<8x128xf32>
    %15 = tpu.matmul %12, %13, %cst_9 {dimension_numbers = #tpu.dot_dimension_numbers<[1], [0], [0], [1], [0, 0, 1, 1], [], []>} : vector<8x256xf32>, vector<256x128xf32>, vector<8x128xf32> -> vector<8x128xf32>
    %16 = vector.broadcast %14 : vector<1x128xf32> to vector<8x128xf32>
    %17 = arith.addf %15, %16 : vector<8x128xf32>
    %c0_10 = arith.constant 0 : index
    %c0_11 = arith.constant 0 : index
    %18 = vector.load %arg2[%c0_10, %c0_11] : memref<8x128xf32, #tpu.memory_space<vmem>>, vector<8x128xf32>
    tpu.vector_store %arg2[%c0_10, %c0_11], %17 {strides = array<i32>} : memref<8x128xf32, #tpu.memory_space<vmem>>, vector<8x128xf32>,
    return
  }
}

</mosaic_0001>

<llo_original>
// kernel: tpu_custom_call.1
$region0: #{tpu_custom_call.1}
  #allocation0 [shape = 'u32[]', space=smem, size = 0x4, offset = 0x4, fixed_abs, tag = 'smem constant byte address 0x4 - core index']
  #allocation1 [shape = 'u32[144,128]{1,0:T(1,128)}', space=vmem, size = 0x12000, scoped, tag = 'internal scratch']
  %s0 = inlined_call_operand.hbm [shape: f32[8,32], index: 0, kind: input, shape index: {}]
  %s1 = inlined_call_operand.hbm [shape: f32[568,256], index: 1, kind: input, shape index: {}]
  %s2 = inlined_call_operand.hbm [shape: f32[8,128], index: 2, kind: output, shape index: {}]
  %s3 = sld [smem:[#allocation0]]
  $region26: #{tpu_custom_call.1} parent=0
    _
  %s5 = ssub.s32 1, %s3
  %s6 = scalar_select 0, %s5, %s3
  $region1: #{tpu_custom_call.1} parent=0
    #allocation2 [shape = 'u8[4096]{0}', space=vmem, size = 0x1000, scoped, tag = 'input window, operand 0, single buffered']
    #allocation3 [shape = 's32[1]{0}', space=sflag, size = 0x4, scoped, tag = 'scoped memory for tpu_custom_call.1']
    #allocation4 [shape = 's32[1]{0}', space=sflag, size = 0x4, scoped, tag = 'scoped memory for tpu_custom_call.1']
    #allocation5 [shape = 'u8[581632]{0}', space=vmem, size = 0x8e000, scoped, tag = 'input window, operand 1, single buffered']
    #allocation6 [shape = 's32[1]{0}', space=sflag, size = 0x4, scoped, tag = 'scoped memory for tpu_custom_call.1']
    #allocation7 [shape = 'u8[4096]{0}', space=vmem, size = 0x1000, scoped, tag = 'output window, operand 0, single buffered']
    %7 = vsyncpa [#allocation3], 0
    %8 = vsyncpa [#allocation6], 0
    %9 = vsyncpa [#allocation4], 0
    // Predicated region
    $region2: #{tpu_custom_call.1} parent=1 // pred_check
      _
    $region3: #{tpu_custom_call.1} parent=1 // pred_check_branch
      %11 = sbr.rel (0) target = $region5
    $region4: #{tpu_custom_call.1} parent=1 // pred_region
      %s13 = ssub.s32 128, 128
      %14 = vsyncadd [#allocation3], %s13
      %s16 = sshll.u32 [#allocation2], 4
      %s17 = int_to_ptr.vmem [resolvable:$true] %s16
      %19 = dma.hbm_to_vmem [thread:$0]  %s0, 128, %s17, [#allocation3]
    $region5: #{tpu_custom_call.1} parent=1 // pred_fallthru
      _
    // Predicated region
    $region6: #{tpu_custom_call.1} parent=1 // pred_check
      _
    $region7: #{tpu_custom_call.1} parent=1 // pred_check_branch
      %21 = sbr.rel (0) target = $region9
    $region8: #{tpu_custom_call.1} parent=1 // pred_region
      %s23 = ssub.s32 18176, 18176
      %24 = vsyncadd [#allocation6], %s23
      %s25 = sshll.u32 [#allocation5], 4
      %s26 = int_to_ptr.vmem [resolvable:$true] %s25
      %31 = dma.hbm_to_vmem [thread:$0]  %s1, 18176, %s26, [#allocation6], 256, 256, 16
    $region9: #{tpu_custom_call.1} parent=1 // pred_fallthru
      _
    // Predicated region
    $region10: #{tpu_custom_call.1} parent=1 // pred_check
      _
    $region11: #{tpu_custom_call.1} parent=1 // pred_check_branch
      %33 = sbr.rel (0) target = $region13
    $region12: #{tpu_custom_call.1} parent=1 // pred_region
      %34 = dma.done [#allocation3], 128
    $region13: #{tpu_custom_call.1} parent=1 // pred_fallthru
      _
    // Predicated region
    $region14: #{tpu_custom_call.1} parent=1 // pred_check
      _
    $region15: #{tpu_custom_call.1} parent=1 // pred_check_branch
      %36 = sbr.rel (0) target = $region17
    $region16: #{tpu_custom_call.1} parent=1 // pred_region
      %37 = dma.done [#allocation6], 18176
    $region17: #{tpu_custom_call.1} parent=1 // pred_fallthru
      _
    %v38 = vld [vmem:[#allocation2] sm:$0xff]
    %v39 = vld [vmem:[#allocation5] sm:$0xff]
    %v40 = vld [vmem:[#allocation5 + $0x8] sm:$0xff]
    %v41 = vld [vmem:[#allocation5 + $0x10] sm:$0xff]
    %v42 = vld [vmem:[#allocation5 + $0x18] sm:$0xff]
    %v43 = vld [vmem:[#allocation5 + $0x20] sm:$0xff]
    %v44 = vld [vmem:[#allocation5 + $0x28] sm:$0xff]
    %v45 = vld [vmem:[#allocation5 + $0x30] sm:$0xff]
    %v46 = vld [vmem:[#allocation5 + $0x38] sm:$0xff]
    %s47 = scalar_lea.vmem [#allocation5], 1088
    %v48 = vld [vmem:[%s47] ss:$8 sm:$0x3]
    %v50 = vlaneseq
    %v51 = vshrl.u32 %v50, 7
    %v52 = vsub.s32 0, %v51
    %v53 = vrot.slane %v48, %v52
    %v54 = vlaneseq
    %v55 = vshrl.u32 %v54, 7
    %v56 = vsub.s32 1, %v55
    %v57 = vrot.slane %v48, %v56
    %vm60 = vcmask 261120
    %v62 = vsel %vm60, %v38, 0
    %64 = vmatprep.subr.mxu0 %v40
    %65 = vmatpush1.msra.mxu0 %v39
    %66 = vmatprep.subr.mxu0 %v42
    %67 = vmatpush1.msra.mxu0 %v41
    %68 = vmatprep.subr.mxu0 %v44
    %69 = vmatpush1.msra.mxu0 %v43
    %70 = vmatprep.subr.mxu0 %v46
    %71 = vmatpush1.msra.mxu0 %v45
    %72 = vmatprep.subr.mxu0 0.0
    %73 = vmatpush1.msra.mxu0 0.0
    %74 = vmatprep.subr.mxu0 0.0
    %75 = vmatpush1.msra.mxu0 0.0
    %76 = vmatprep.subr.mxu0 0.0
    %77 = vmatpush1.msra.mxu0 0.0
    %78 = vmatprep.subr.mxu0 0.0
    %79 = vmatpush1.msra.mxu0 0.0
    %80 = vmatprep.subr.mxu0 0.0
    %81 = vmatpush1.msra.mxu0 0.0
    %82 = vmatprep.subr.mxu0 0.0
    %83 = vmatpush1.msra.mxu0 0.0
    %84 = vmatprep.subr.mxu0 0.0
    %85 = vmatpush1.msra.mxu0 0.0
    %86 = vmatprep.subr.mxu0 0.0
    %87 = vmatpush1.msra.mxu0 0.0
    %88 = vmatprep.subr.mxu0 0.0
    %89 = vmatpush1.msra.mxu0 0.0
    %90 = vmatprep.subr.mxu0 0.0
    %91 = vmatpush1.msra.mxu0 0.0
    %92 = vmatprep.subr.mxu0 0.0
    %93 = vmatpush1.msra.mxu0 0.0
    %94 = vmatprep.subr.mxu0 0.0
    %95 = vmatpush1.msra.mxu0 0.0
    %96 = vmatprep.subr.mxu0 0.0
    %97 = vmatpush1.msra.mxu0 0.0
    %98 = vmatprep.subr.mxu0 0.0
    %99 = vmatpush1.msra.mxu0 0.0
    %100 = vmatprep.subr.mxu0 0.0
    %101 = vmatpush1.msra.mxu0 0.0
    %102 = vmatprep.subr.mxu0 0.0
    %103 = vmatpush1.msra.mxu0 0.0
    %104 = vmatprep.subr.mxu0 0.0
    %105 = vmatpush1.msra.mxu0 0.0
    %106 = vmatprep.subr.mxu0 0.0
    %107 = vmatpush1.msra.mxu0 0.0
    %108 = vmatprep.subr.mxu0 0.0
    %109 = vmatpush1.msra.mxu0 0.0
    %110 = vmatprep.subr.mxu0 0.0
    %111 = vmatpush1.msra.mxu0 0.0
    %112 = vmatprep.subr.mxu0 0.0
    %113 = vmatpush1.msra.mxu0 0.0
    %114 = vmatprep.subr.mxu0 0.0
    %115 = vmatpush1.msra.mxu0 0.0
    %116 = vmatprep.subr.mxu0 0.0
    %117 = vmatpush1.msra.mxu0 0.0
    %118 = vmatprep.subr.mxu0 0.0
    %119 = vmatpush1.msra.mxu0 0.0
    %120 = vmatprep.subr.mxu0 0.0
    %121 = vmatpush1.msra.mxu0 0.0
    %122 = vmatprep.subr.mxu0 0.0
    %123 = vmatpush1.msra.mxu0 0.0
    %124 = vmatprep.subr.mxu0 0.0
    %125 = vmatpush1.msra.mxu0 0.0
    %126 = vmatprep.subr.mxu0 0.0
    %127 = vmatpush1.msra.mxu0 0.0
    %128 = vmatprep.mubr.f32.mxu0 0.0
    %129 = vmatmul.mubr.f32.gmra.mrb[0].mxu0 %v62
    %v130 = vpop.f32.mrb[0].mxu0
    %v131 = vadd.f32 %v53, %v130
    %v132 = vpop.f32.mrb[0].mxu0
    %v133 = vadd.f32 %v57, %v132
    %134 = vdwg.mxu0
    %v135 = vtanh.pop %v131
    %v136 = vtanh.pop %v133
    %v137 = vld [vmem:[#allocation5 + $0x40] sm:$0xff]
    %v138 = vld [vmem:[#allocation5 + $0x48] sm:$0xff]
    %v139 = vld [vmem:[#allocation5 + $0x50] sm:$0xff]
    %v140 = vld [vmem:[#allocation5 + $0x58] sm:$0xff]
    %v141 = vld [vmem:[#allocation5 + $0x60] sm:$0xff]
    %v142 = vld [vmem:[#allocation5 + $0x68] sm:$0xff]
    %v143 = vld [vmem:[#allocation5 + $0x70] sm:$0xff]
    %v144 = vld [vmem:[#allocation5 + $0x78] sm:$0xff]
    %v145 = vld [vmem:[#allocation5 + $0x80] sm:$0xff]
    %v146 = vld [vmem:[#allocation5 + $0x88] sm:$0xff]
    %v147 = vld [vmem:[#allocation5 + $0x90] sm:$0xff]
    %v148 = vld [vmem:[#allocation5 + $0x98] sm:$0xff]
    %v149 = vld [vmem:[#allocation5 + $0xa0] sm:$0xff]
    %v150 = vld [vmem:[#allocation5 + $0xa8] sm:$0xff]
    %v151 = vld [vmem:[#allocation5 + $0xb0] sm:$0xff]
    %v152 = vld [vmem:[#allocation5 + $0xb8] sm:$0xff]
    %v153 = vld [vmem:[#allocation5 + $0xc0] sm:$0xff]
    %v154 = vld [vmem:[#allocation5 + $0xc8] sm:$0xff]
    %v155 = vld [vmem:[#allocation5 + $0xd0] sm:$0xff]
    %v156 = vld [vmem:[#allocation5 + $0xd8] sm:$0xff]
    %v157 = vld [vmem:[#allocation5 + $0xe0] sm:$0xff]
    %v158 = vld [vmem:[#allocation5 + $0xe8] sm:$0xff]
    %v159 = vld [vmem:[#allocation5 + $0xf0] sm:$0xff]
    %v160 = vld [vmem:[#allocation5 + $0xf8] sm:$0xff]
    %v161 = vld [vmem:[#allocation5 + $0x100] sm:$0xff]
    %v162 = vld [vmem:[#allocation5 + $0x108] sm:$0xff]
    %v163 = vld [vmem:[#allocation5 + $0x110] sm:$0xff]
    %v164 = vld [vmem:[#allocation5 + $0x118] sm:$0xff]
    %v165 = vld [vmem:[#allocation5 + $0x120] sm:$0xff]
    %v166 = vld [vmem:[#allocation5 + $0x128] sm:$0xff]
    %v167 = vld [vmem:[#allocation5 + $0x130] sm:$0xff]
    %v168 = vld [vmem:[#allocation5 + $0x138] sm:$0xff]
    %v169 = vld [vmem:[#allocation5 + $0x140] sm:$0xff]
    %v170 = vld [vmem:[#allocation5 + $0x148] sm:$0xff]
    %v171 = vld [vmem:[#allocation5 + $0x150] sm:$0xff]
    %v172 = vld [vmem:[#allocation5 + $0x158] sm:$0xff]
    %v173 = vld [vmem:[#allocation5 + $0x160] sm:$0xff]
    %v174 = vld [vmem:[#allocation5 + $0x168] sm:$0xff]
    %v175 = vld [vmem:[#allocation5 + $0x170] sm:$0xff]
    %v176 = vld [vmem:[#allocation5 + $0x178] sm:$0xff]
    %v177 = vld [vmem:[#allocation5 + $0x180] sm:$0xff]
    %v178 = vld [vmem:[#allocation5 + $0x188] sm:$0xff]
    %v179 = vld [vmem:[#allocation5 + $0x190] sm:$0xff]
    %v180 = vld [vmem:[#allocation5 + $0x198] sm:$0xff]
    %v181 = vld [vmem:[#allocation5 + $0x1a0] sm:$0xff]
    %v182 = vld [vmem:[#allocation5 + $0x1a8] sm:$0xff]
    %v183 = vld [vmem:[#allocation5 + $0x1b0] sm:$0xff]
    %v184 = vld [vmem:[#allocation5 + $0x1b8] sm:$0xff]
    %v185 = vld [vmem:[#allocation5 + $0x1c0] sm:$0xff]
    %v186 = vld [vmem:[#allocation5 + $0x1c8] sm:$0xff]
    %v187 = vld [vmem:[#allocation5 + $0x1d0] sm:$0xff]
    %v188 = vld [vmem:[#allocation5 + $0x1d8] sm:$0xff]
    %v189 = vld [vmem:[#allocation5 + $0x1e0] sm:$0xff]
    %v190 = vld [vmem:[#allocation5 + $0x1e8] sm:$0xff]
    %v191 = vld [vmem:[#allocation5 + $0x1f0] sm:$0xff]
    %v192 = vld [vmem:[#allocation5 + $0x1f8] sm:$0xff]
    %v193 = vld [vmem:[#allocation5 + $0x200] sm:$0xff]
    %v194 = vld [vmem:[#allocation5 + $0x208] sm:$0xff]
    %v195 = vld [vmem:[#allocation5 + $0x210] sm:$0xff]
    %v196 = vld [vmem:[#allocation5 + $0x218] sm:$0xff]
    %v197 = vld [vmem:[#allocation5 + $0x220] sm:$0xff]
    %v198 = vld [vmem:[#allocation5 + $0x228] sm:$0xff]
    %v199 = vld [vmem:[#allocation5 + $0x230] sm:$0xff]
    %v200 = vld [vmem:[#allocation5 + $0x238] sm:$0xff]
    %s201 = scalar_lea.vmem [#allocation5], 1104
    %v202 = vld [vmem:[%s201] ss:$8 sm:$0x3]
    %v204 = vlaneseq
    %v205 = vshrl.u32 %v204, 7
    %v206 = vsub.s32 0, %v205
    %v207 = vrot.slane %v202, %v206
    %v208 = vlaneseq
    %v209 = vshrl.u32 %v208, 7
    %v210 = vsub.s32 1, %v209
    %v211 = vrot.slane %v202, %v210
    %214 = vmatprep.subr.mxu0 %v138
    %215 = vmatpush1.msra.mxu0 %v137
    %216 = vmatprep.subr.mxu0 %v140
    %217 = vmatpush1.msra.mxu0 %v139
    %218 = vmatprep.subr.mxu0 %v142
    %219 = vmatpush1.msra.mxu0 %v141
    %220 = vmatprep.subr.mxu0 %v144
    %221 = vmatpush1.msra.mxu0 %v143
    %222 = vmatprep.subr.mxu0 %v146
    %223 = vmatpush1.msra.mxu0 %v145
    %224 = vmatprep.subr.mxu0 %v148
    %225 = vmatpush1.msra.mxu0 %v147
    %226 = vmatprep.subr.mxu0 %v150
    %227 = vmatpush1.msra.mxu0 %v149
    %228 = vmatprep.subr.mxu0 %v152
    %229 = vmatpush1.msra.mxu0 %v151
    %230 = vmatprep.subr.mxu0 %v154
    %231 = vmatpush1.msra.mxu0 %v153
    %232 = vmatprep.subr.mxu0 %v156
    %233 = vmatpush1.msra.mxu0 %v155
    %234 = vmatprep.subr.mxu0 %v158
    %235 = vmatpush1.msra.mxu0 %v157
    %236 = vmatprep.subr.mxu0 %v160
    %237 = vmatpush1.msra.mxu0 %v159
    %238 = vmatprep.subr.mxu0 %v162
    %239 = vmatpush1.msra.mxu0 %v161
    %240 = vmatprep.subr.mxu0 %v164
    %241 = vmatpush1.msra.mxu0 %v163
    %242 = vmatprep.subr.mxu0 %v166
    %243 = vmatpush1.msra.mxu0 %v165
    %244 = vmatprep.subr.mxu0 %v168
    %245 = vmatpush1.msra.mxu0 %v167
    %246 = vmatprep.subr.mxu0 %v170
    %247 = vmatpush1.msra.mxu0 %v169
    %248 = vmatprep.subr.mxu0 %v172
    %249 = vmatpush1.msra.mxu0 %v171
    %250 = vmatprep.subr.mxu0 %v174
    %251 = vmatpush1.msra.mxu0 %v173
    %252 = vmatprep.subr.mxu0 %v176
    %253 = vmatpush1.msra.mxu0 %v175
    %254 = vmatprep.subr.mxu0 %v178
    %255 = vmatpush1.msra.mxu0 %v177
    %256 = vmatprep.subr.mxu0 %v180
    %257 = vmatpush1.msra.mxu0 %v179
    %258 = vmatprep.subr.mxu0 %v182
    %259 = vmatpush1.msra.mxu0 %v181
    %260 = vmatprep.subr.mxu0 %v184
    %261 = vmatpush1.msra.mxu0 %v183
    %262 = vmatprep.subr.mxu0 %v186
    %263 = vmatpush1.msra.mxu0 %v185
    %264 = vmatprep.subr.mxu0 %v188
    %265 = vmatpush1.msra.mxu0 %v187
    %266 = vmatprep.subr.mxu0 %v190
    %267 = vmatpush1.msra.mxu0 %v189
    %268 = vmatprep.subr.mxu0 %v192
    %269 = vmatpush1.msra.mxu0 %v191
    %270 = vmatprep.subr.mxu0 %v194
    %271 = vmatpush1.msra.mxu0 %v193
    %272 = vmatprep.subr.mxu0 %v196
    %273 = vmatpush1.msra.mxu0 %v195
    %274 = vmatprep.subr.mxu0 %v198
    %275 = vmatpush1.msra.mxu0 %v197
    %276 = vmatprep.subr.mxu0 %v200
    %277 = vmatpush1.msra.mxu0 %v199
    %278 = vmatprep.mubr.f32.mxu0 %v136
    %279 = vmatmul.mubr.f32.gmra.mrb[0].mxu0 %v135
    %v280 = vpop.f32.mrb[0].mxu0
    %v281 = vadd.f32 %v207, %v280
    %v282 = vpop.f32.mrb[0].mxu0
    %v283 = vadd.f32 %v211, %v282
    %284 = vdwg.mxu0
    %v285 = vtanh.pop %v281
    %v286 = vtanh.pop %v283
    %v287 = vld [vmem:[#allocation5 + $0x240] sm:$0xff]
    %v288 = vld [vmem:[#allocation5 + $0x250] sm:$0xff]
    %v289 = vld [vmem:[#allocation5 + $0x260] sm:$0xff]
    %v290 = vld [vmem:[#allocation5 + $0x270] sm:$0xff]
    %v291 = vld [vmem:[#allocation5 + $0x280] sm:$0xff]
    %v292 = vld [vmem:[#allocation5 + $0x290] sm:$0xff]
    %v293 = vld [vmem:[#allocation5 + $0x2a0] sm:$0xff]
    %v294 = vld [vmem:[#allocation5 + $0x2b0] sm:$0xff]
    %v295 = vld [vmem:[#allocation5 + $0x2c0] sm:$0xff]
    %v296 = vld [vmem:[#allocation5 + $0x2d0] sm:$0xff]
    %v297 = vld [vmem:[#allocation5 + $0x2e0] sm:$0xff]
    %v298 = vld [vmem:[#allocation5 + $0x2f0] sm:$0xff]
    %v299 = vld [vmem:[#allocation5 + $0x300] sm:$0xff]
    %v300 = vld [vmem:[#allocation5 + $0x310] sm:$0xff]
    %v301 = vld [vmem:[#allocation5 + $0x320] sm:$0xff]
    %v302 = vld [vmem:[#allocation5 + $0x330] sm:$0xff]
    %v303 = vld [vmem:[#allocation5 + $0x340] sm:$0xff]
    %v304 = vld [vmem:[#allocation5 + $0x350] sm:$0xff]
    %v305 = vld [vmem:[#allocation5 + $0x360] sm:$0xff]
    %v306 = vld [vmem:[#allocation5 + $0x370] sm:$0xff]
    %v307 = vld [vmem:[#allocation5 + $0x380] sm:$0xff]
    %v308 = vld [vmem:[#allocation5 + $0x390] sm:$0xff]
    %v309 = vld [vmem:[#allocation5 + $0x3a0] sm:$0xff]
    %v310 = vld [vmem:[#allocation5 + $0x3b0] sm:$0xff]
    %v311 = vld [vmem:[#allocation5 + $0x3c0] sm:$0xff]
    %v312 = vld [vmem:[#allocation5 + $0x3d0] sm:$0xff]
    %v313 = vld [vmem:[#allocation5 + $0x3e0] sm:$0xff]
    %v314 = vld [vmem:[#allocation5 + $0x3f0] sm:$0xff]
    %v315 = vld [vmem:[#allocation5 + $0x400] sm:$0xff]
    %v316 = vld [vmem:[#allocation5 + $0x410] sm:$0xff]
    %v317 = vld [vmem:[#allocation5 + $0x420] sm:$0xff]
    %v318 = vld [vmem:[#allocation5 + $0x430] sm:$0xff]
    %v319 = vld [vmem:[#allocation5 + $0x460] ss:$0 sm:$0xff]
    %320 = vmatprep.subr.mxu0 0.0
    %321 = vmatpush1.msra.mxu0 %v287
    %322 = vmatprep.subr.mxu0 0.0
    %323 = vmatpush1.msra.mxu0 %v288
    %324 = vmatprep.subr.mxu0 0.0
    %325 = vmatpush1.msra.mxu0 %v289
    %326 = vmatprep.subr.mxu0 0.0
    %327 = vmatpush1.msra.mxu0 %v290
    %328 = vmatprep.subr.mxu0 0.0
    %329 = vmatpush1.msra.mxu0 %v291
    %330 = vmatprep.subr.mxu0 0.0
    %331 = vmatpush1.msra.mxu0 %v292
    %332 = vmatprep.subr.mxu0 0.0
    %333 = vmatpush1.msra.mxu0 %v293
    %334 = vmatprep.subr.mxu0 0.0
    %335 = vmatpush1.msra.mxu0 %v294
    %336 = vmatprep.subr.mxu0 0.0
    %337 = vmatpush1.msra.mxu0 %v295
    %338 = vmatprep.subr.mxu0 0.0
    %339 = vmatpush1.msra.mxu0 %v296
    %340 = vmatprep.subr.mxu0 0.0
    %341 = vmatpush1.msra.mxu0 %v297
    %342 = vmatprep.subr.mxu0 0.0
    %343 = vmatpush1.msra.mxu0 %v298
    %344 = vmatprep.subr.mxu0 0.0
    %345 = vmatpush1.msra.mxu0 %v299
    %346 = vmatprep.subr.mxu0 0.0
    %347 = vmatpush1.msra.mxu0 %v300
    %348 = vmatprep.subr.mxu0 0.0
    %349 = vmatpush1.msra.mxu0 %v301
    %350 = vmatprep.subr.mxu0 0.0
    %351 = vmatpush1.msra.mxu0 %v302
    %352 = vmatprep.subr.mxu0 0.0
    %353 = vmatpush1.msra.mxu0 %v303
    %354 = vmatprep.subr.mxu0 0.0
    %355 = vmatpush1.msra.mxu0 %v304
    %356 = vmatprep.subr.mxu0 0.0
    %357 = vmatpush1.msra.mxu0 %v305
    %358 = vmatprep.subr.mxu0 0.0
    %359 = vmatpush1.msra.mxu0 %v306
    %360 = vmatprep.subr.mxu0 0.0
    %361 = vmatpush1.msra.mxu0 %v307
    %362 = vmatprep.subr.mxu0 0.0
    %363 = vmatpush1.msra.mxu0 %v308
    %364 = vmatprep.subr.mxu0 0.0
    %365 = vmatpush1.msra.mxu0 %v309
    %366 = vmatprep.subr.mxu0 0.0
    %367 = vmatpush1.msra.mxu0 %v310
    %368 = vmatprep.subr.mxu0 0.0
    %369 = vmatpush1.msra.mxu0 %v311
    %370 = vmatprep.subr.mxu0 0.0
    %371 = vmatpush1.msra.mxu0 %v312
    %372 = vmatprep.subr.mxu0 0.0
    %373 = vmatpush1.msra.mxu0 %v313
    %374 = vmatprep.subr.mxu0 0.0
    %375 = vmatpush1.msra.mxu0 %v314
    %376 = vmatprep.subr.mxu0 0.0
    %377 = vmatpush1.msra.mxu0 %v315
    %378 = vmatprep.subr.mxu0 0.0
    %379 = vmatpush1.msra.mxu0 %v316
    %380 = vmatprep.subr.mxu0 0.0
    %381 = vmatpush1.msra.mxu0 %v317
    %382 = vmatprep.subr.mxu0 0.0
    %383 = vmatpush1.msra.mxu0 %v318
    %384 = vmatprep.mubr.f32.mxu0 %v286
    %385 = vmatmul.mubr.f32.gmra.mrb[0].mxu0 %v285
    %v386 = vpop.f32.mrb[0].mxu0
    %v387 = vadd.f32 %v319, %v386
    %v388 = vpop.f32.mrb[0].mxu0
    %389 = vdwg.mxu0
    %390 = vst [vmem:[#allocation7] sm:$0xff] %v387
    // Predicated region
    $region18: #{tpu_custom_call.1} parent=1 // pred_check
      _
    $region19: #{tpu_custom_call.1} parent=1 // pred_check_branch
      %392 = sbr.rel (0) target = $region21
    $region20: #{tpu_custom_call.1} parent=1 // pred_region
      %s394 = ssub.s32 128, 128
      %395 = vsyncadd [#allocation4], %s394
      %s397 = sshll.u32 [#allocation7], 4
      %s398 = int_to_ptr.vmem [resolvable:$true] %s397
      %400 = dma.vmem_to_hbm [thread:$0]  %s398, 128, %s2, [#allocation4]
    $region21: #{tpu_custom_call.1} parent=1 // pred_fallthru
      _
    // Predicated region
    $region22: #{tpu_custom_call.1} parent=1 // pred_check
      _
    $region23: #{tpu_custom_call.1} parent=1 // pred_check_branch
      %402 = sbr.rel (0) target = $region25
    $region24: #{tpu_custom_call.1} parent=1 // pred_region
      %403 = dma.done [#allocation4], 128
    $region25: #{tpu_custom_call.1} parent=1 // pred_fallthru
      _
    %404 = vsyncpa [#allocation3], 1
    %405 = vsyncpa [#allocation6], 1
    %406 = vsyncpa [#allocation4], 1

</llo_original>
